<compile_context>
chip_gen: v7x
topology: tpu7x:2x2x1
jax: 0.10.0
libtpu: 0.0.40
codegen_flags: <defaults>
</compile_context>

<pallas_src>
import functools
import math

import jax
import jax.numpy as jnp
from jax.experimental import pallas as pl
from jax.experimental.pallas import tpu as pltpu

BN_EPS = 1e-5


def _rep_block_kernel(x_ref, s1_ref, t1_ref, w1_ref, w2_ref, o_ref, *, L, K, mxu_dtype):
    # x_ref : (Cin, nb*L)   channels on sublanes, flattened (batch, time) on lanes
    # w*_ref: (C_out, Rpad) im2col weights; column K*Cin holds the folded bias,
    #                       remaining columns are zero padding (sublane alignment)
    # o_ref : (Cout, nb*L)
    Cin, nbL = x_ref.shape
    Rpad = w1_ref.shape[1]
    p = K // 2

    # ---- BN1 (eval, per-channel affine) + ReLU: full-slab f32 VPU ops.
    h = jnp.maximum(x_ref[...] * s1_ref[...] + t1_ref[...], 0.0)          # (Cin, nbL)

    # Position of each lane inside its own length-L sequence (conv boundary masks).
    j = jax.lax.broadcasted_iota(jnp.int32, (Cin, nbL), 1) % L

    ones_row = jnp.ones((1, nbL), jnp.float32)                            # bias fold
    n_zero = Rpad - (K * Cin + 1)
    zero_rows = jnp.zeros((n_zero, nbL), jnp.float32) if n_zero else None

    def im2col(hh):
        # K length-shifted copies built with XLU rolls + cheap VPU boundary masks
        # (no per-batch slicing), stacked on the sublane axis, plus a ones row for
        # the bias and zero rows to round the contracted dim up to a multiple of 8.
        rows = []
        for k in range(K):
            s = k - p                        # window offset relative to output index
            if s == 0:
                rows.append(hh)
            else:
                r = pltpu.roll(hh, shift=(-s) % nbL, axis=1)
                valid = (j >= -s) & (j < L - s)      # zero-padding at sequence edges
                rows.append(jnp.where(valid, r, 0.0))
        rows.append(ones_row)
        if zero_rows is not None:
            rows.append(zero_rows)
        return jnp.concatenate(rows, axis=0).astype(mxu_dtype)            # (Rpad, nbL)

    # conv1 (+ BN2 and bias folded into w1) -> ReLU : one MXU matmul, f32 accumulate.
    y1 = jnp.maximum(
        jnp.dot(w1_ref[...], im2col(h), preferred_element_type=jnp.float32), 0.0)
    # conv2 (+ BN3 and bias folded into w2) -> ReLU : one MXU matmul, f32 accumulate.
    y2 = jnp.maximum(
        jnp.dot(w2_ref[...], im2col(y1), preferred_element_type=jnp.float32), 0.0)

    # Lane-dense store of the full slab; the [:-2] trim happens in the wrapper.
    o_ref[...] = y2.astype(o_ref.dtype)


def _bn_affine(gamma, beta, mean, var):
    s = gamma / jnp.sqrt(var + BN_EPS)
    t = beta - mean * s
    return s.astype(jnp.float32), t.astype(jnp.float32)


def _cdiv(a, b):
    return -(-a // b)


def _choose_nb(n, L, target_lanes=1024):
    """Batch elements per grid step: nb*L a multiple of 128, ~target_lanes lanes,
    and (when the batch allows it) >= 2 grid steps so both v7x TensorCores get work."""
    unit = max(1, 128 // math.gcd(L, 128))                # nb % unit == 0 -> nb*L % 128 == 0
    cap = max(unit, (max(target_lanes // L, unit) // unit) * unit)
    if n <= unit:
        return unit
    half = _cdiv(_cdiv(n, 2), unit) * unit                # ~half the batch per step
    return min(cap, half)


def rep_block_forward(x_ncl, params, kernel_size, batch_block=None,
                      mxu_dtype=jnp.bfloat16):
    """x_ncl: (N, Cin, L) float32, PyTorch NCL layout. Returns (N, Cout, L-2)."""
    N, Cin, L = x_ncl.shape
    K = kernel_size
    assert K % 2 == 1, "kernel_size must be odd (PyTorch padding=K//2 + [:-2] semantics)"
    Cout = params["w2"].shape[2]
    Lout = L - 2

    # ---------------- host-side constant folding ----------------
    s1, t1 = _bn_affine(*params["bn1"])                  # (Cin,)
    s2, t2 = _bn_affine(*params["bn2"])                  # (Cin,)
    s3, t3 = _bn_affine(*params["bn3"])                  # (Cout,)

    w1 = params["w1"].astype(jnp.float32)                # (K, Cin, Cin)   w[k, ci, co]
    w2 = params["w2"].astype(jnp.float32)                # (K, Cin, Cout)
    b1 = params["b1"].astype(jnp.float32)
    b2 = params["b2"].astype(jnp.float32)

    # Fold BN2 into conv1 and BN3 into conv2 (eval BN is a per-output-channel affine):
    #   relu((conv(h) + b) * s + t) == relu(conv_{w*s}(h) + (b*s + t))
    w1f = w1 * s2[None, None, :]
    w2f = w2 * s3[None, None, :]
    b1f = b1 * s2 + t2                                   # (Cin,)
    b2f = b2 * s3 + t3                                   # (Cout,)

    # im2col weight layout: W[co, k*Cin + ci] = w[k, ci, co]; the bias goes into an
    # extra column (matched by a ones row in the kernel) and the contracted dim is
    # zero-padded up to a multiple of 8 for sublane alignment.
    R = K * Cin + 1
    Rpad = _cdiv(R, 8) * 8

    def pack_weight(wf, bf, cout):
        Wm = jnp.transpose(wf, (2, 0, 1)).reshape(cout, K * Cin)
        Wa = jnp.concatenate(
            [Wm, bf.reshape(cout, 1), jnp.zeros((cout, Rpad - R), jnp.float32)], axis=1)
        return Wa.astype(mxu_dtype)

    W1 = pack_weight(w1f, b1f, Cin)                      # (Cin,  Rpad)
    W2 = pack_weight(w2f, b2f, Cout)                     # (Cout, Rpad)
    S1 = s1.reshape(Cin, 1)
    T1 = t1.reshape(Cin, 1)

    # ---------------- lane-dense layout & batch blocking ----------------
    nb = batch_block if batch_block is not None else _choose_nb(N, L)
    Npad = _cdiv(N, nb) * nb
    grid = (Npad // nb,)

    xp = x_ncl.astype(jnp.float32)
    if Npad != N:
        xp = jnp.pad(xp, ((0, Npad - N), (0, 0), (0, 0)))
    # (N, Cin, L) -> (Cin, Npad*L): channels on sublanes, (batch, time) flat on lanes.
    x_flat = jnp.transpose(xp, (1, 0, 2)).reshape(Cin, Npad * L)

    kernel = functools.partial(_rep_block_kernel, L=L, K=K, mxu_dtype=mxu_dtype)

    def const_spec(shape):
        return pl.BlockSpec(shape, lambda n: (0, 0))

    out_flat = pl.pallas_call(
        kernel,
        out_shape=jax.ShapeDtypeStruct((Cout, Npad * L), jnp.float32),
        grid_spec=pltpu.PrefetchScalarGridSpec(
            num_scalar_prefetch=0,
            grid=grid,
            in_specs=[
                pl.BlockSpec((Cin, nb * L), lambda n: (0, n)),   # x slab (lane-dense)
                const_spec((Cin, 1)), const_spec((Cin, 1)),      # BN1 affine
                const_spec((Cin, Rpad)),                         # conv1 (BN2+bias folded)
                const_spec((Cout, Rpad)),                        # conv2 (BN3+bias folded)
            ],
            out_specs=pl.BlockSpec((Cout, nb * L), lambda n: (0, n)),
        ),
        compiler_params=pltpu.CompilerParams(dimension_semantics=("parallel",)),
    )(x_flat, S1, T1, W1, W2)

    # Cheap XLA epilogue: drop batch padding, restore NCL, apply the [:-2] trim.
    out = jnp.transpose(out_flat.reshape(Cout, Npad, L), (1, 0, 2))[:N, :, :Lout]
    return out


def rep_block_reference(x, params, kernel_size):
    """Plain-JAX reference in PyTorch NCL layout (eval-mode BN / identity dropout)."""
    p = kernel_size // 2

    def bn(h, gamma, beta, mean, var):
        return ((h - mean[None, :, None]) / jnp.sqrt(var[None, :, None] + BN_EPS)
                * gamma[None, :, None] + beta[None, :, None])

    def conv(h, w_kio, bias):
        w_oik = jnp.transpose(w_kio, (2, 1, 0))  # (Cout, Cin, K)
        y = jax.lax.conv_general_dilated(
            h, w_oik, window_strides=(1,), padding=[(p, p)],
            dimension_numbers=("NCH", "OIH", "NCH"))
        return y + bias[None, :, None]

    h = jax.nn.relu(bn(x, *params["bn1"]))
    h = conv(h, params["w1"], params["b1"])
    h = jax.nn.relu(bn(h, *params["bn2"]))
    h = conv(h, params["w2"], params["b2"])
    h = jax.nn.relu(bn(h, *params["bn3"]))
    return h[:, :, :-2]


def make_params(key, cin, cout, k):
    ks = jax.random.split(key, 16)

    def bn_params(k0, k1, k2, k3, c):
        gamma = 1.0 + 0.1 * jax.random.normal(k0, (c,), jnp.float32)
        beta = 0.1 * jax.random.normal(k1, (c,), jnp.float32)
        mean = 0.1 * jax.random.normal(k2, (c,), jnp.float32)
        var = jax.random.uniform(k3, (c,), jnp.float32, 0.5, 1.5)
        return (gamma, beta, mean, var)

    return {
        "bn1": bn_params(ks[0], ks[1], ks[2], ks[3], cin),
        "w1": 0.2 * jax.random.normal(ks[4], (k, cin, cin), jnp.float32),
        "b1": 0.1 * jax.random.normal(ks[5], (cin,), jnp.float32),
        "bn2": bn_params(ks[6], ks[7], ks[8], ks[9], cin),
        "w2": 0.2 * jax.random.normal(ks[10], (k, cin, cout), jnp.float32),
        "b2": 0.1 * jax.random.normal(ks[11], (cout,), jnp.float32),
        "bn3": bn_params(ks[12], ks[13], ks[14], ks[15], cout),
    }


if __name__ == "__main__":
    # Small shapes: batch=2, in_channels=4, out_channels=8, kernel_size=3, seq=16.
    N, CIN, COUT, K, L = 2, 4, 8, 3, 16

    key = jax.random.PRNGKey(0)
    kx, kp = jax.random.split(key)
    x = jax.random.normal(kx, (N, CIN, L), jnp.float32)   # PyTorch NCL input
    params = make_params(kp, CIN, COUT, K)

    out = jax.block_until_ready(rep_block_forward(x, params, K))
    ref = rep_block_reference(x, params, K)

    assert out.shape == (N, COUT, L - 2), out.shape
    max_err = float(jnp.max(jnp.abs(out - ref)))
    # bf16 MXU feed (f32 accumulation) -> loosened tolerance per review.
    assert jnp.allclose(out, ref, atol=2e-2, rtol=2e-2), max_err

    print("KERNEL_OK")
</pallas_src>

<mosaic_0001>
module attributes {stable_mosaic.version = 11 : i64} {
  func.func @_rep_block_kernel(%arg0: i32, %arg1: memref<4x128xf32, #tpu.memory_space<vmem>>, %arg2: memref<4x1xf32, #tpu.memory_space<vmem>>, %arg3: memref<4x1xf32, #tpu.memory_space<vmem>>, %arg4: memref<4x16xbf16, #tpu.memory_space<vmem>>, %arg5: memref<8x16xbf16, #tpu.memory_space<vmem>>, %arg6: memref<8x128xf32, #tpu.memory_space<vmem>>) attributes {dimension_semantics = [#tpu.dimension_semantics<parallel>], iteration_bounds = array<i64: 1>, scalar_prefetch = 0 : i64, scratch_operands = 0 : i64, tpu.core_type = #tpu.core_type<tc>, window_params = [{transform_indices = @transform_0, window_bounds = array<i64: 4, 128>}, {pipeline_mode = #tpu.pipeline_mode<synchronous>, transform_indices = @transform_1, window_bounds = array<i64: 4, 1>}, {pipeline_mode = #tpu.pipeline_mode<synchronous>, transform_indices = @transform_2, window_bounds = array<i64: 4, 1>}, {pipeline_mode = #tpu.pipeline_mode<synchronous>, transform_indices = @transform_3, window_bounds = array<i64: 4, 16>}, {pipeline_mode = #tpu.pipeline_mode<synchronous>, transform_indices = @transform_4, window_bounds = array<i64: 8, 16>}, {transform_indices = @transform_5, window_bounds = array<i64: 8, 128>}]} {
    %c0 = arith.constant 0 : index
    %c0_0 = arith.constant 0 : index
    %0 = vector.load %arg1[%c0, %c0_0] : memref<4x128xf32, #tpu.memory_space<vmem>>, vector<4x128xf32>
    %c0_1 = arith.constant 0 : index
    %c0_2 = arith.constant 0 : index
    %1 = vector.load %arg2[%c0_1, %c0_2] : memref<4x1xf32, #tpu.memory_space<vmem>>, vector<4x1xf32>
    %2 = vector.broadcast %1 : vector<4x1xf32> to vector<4x128xf32>
    %3 = arith.mulf %0, %2 : vector<4x128xf32>
    %c0_3 = arith.constant 0 : index
    %c0_4 = arith.constant 0 : index
    %4 = vector.load %arg3[%c0_3, %c0_4] : memref<4x1xf32, #tpu.memory_space<vmem>>, vector<4x1xf32>
    %5 = vector.broadcast %4 : vector<4x1xf32> to vector<4x128xf32>
    %6 = arith.addf %3, %5 : vector<4x128xf32>
    %cst = arith.constant 0.000000e+00 : f32
    %7 = vector.broadcast %cst : f32 to vector<4x128xf32>
    %8 = arith.maximumf %6, %7 : vector<4x128xf32>
    %9 = tpu.iota {dimensions = array<i32: 1>} : vector<4x128xi32>
    %c16_i32 = arith.constant 16 : i32
    %c0_i32 = arith.constant 0 : i32
    %10 = arith.cmpi eq, %c16_i32, %c0_i32 : i32
    %c1_i32 = arith.constant 1 : i32
    %11 = arith.select %10, %c1_i32, %c16_i32 : i32
    %12 = vector.broadcast %11 : i32 to vector<4x128xi32>
    %13 = arith.remsi %9, %12 : vector<4x128xi32>
    %c0_i32_5 = arith.constant 0 : i32
    %14 = vector.broadcast %c0_i32_5 : i32 to vector<4x128xi32>
    %15 = arith.cmpi ne, %13, %14 : vector<4x128xi32>
    %c0_i32_6 = arith.constant 0 : i32
    %16 = vector.broadcast %c0_i32_6 : i32 to vector<4x128xi32>
    %17 = arith.cmpi slt, %13, %16 : vector<4x128xi32>
    %c0_i32_7 = arith.constant 0 : i32
    %18 = arith.cmpi slt, %11, %c0_i32_7 : i32
    %19 = vector.broadcast %18 : i1 to vector<4x128xi1>
    %20 = vector.broadcast %19 : vector<4x128xi1> to vector<4x128xi1>
    %21 = arith.xori %17, %20 : vector<4x128xi1>
    %22 = arith.andi %21, %15 : vector<4x128xi1>
    %23 = vector.broadcast %11 : i32 to vector<4x128xi32>
    %24 = arith.addi %13, %23 : vector<4x128xi32>
    %25 = arith.select %22, %24, %13 : vector<4x128xi1>, vector<4x128xi32>
    %cst_8 = arith.constant 1.000000e+00 : f32
    %26 = vector.broadcast %cst_8 : f32 to vector<1x128xf32>
    %cst_9 = arith.constant 0.000000e+00 : f32
    %27 = vector.broadcast %cst_9 : f32 to vector<3x128xf32>
    %c0_10 = arith.constant 0 : index
    %c0_11 = arith.constant 0 : index
    %28 = vector.load %arg4[%c0_10, %c0_11] : memref<4x16xbf16, #tpu.memory_space<vmem>>, vector<4x16xbf16>
    %c1_i32_12 = arith.constant 1 : i32
    %29 = tpu.dynamic_rotate %8 by %c1_i32_12 dim 1 : vector<4x128xf32>, i32 -> vector<4x128xf32>
    %c1_i32_13 = arith.constant 1 : i32
    %30 = vector.broadcast %c1_i32_13 : i32 to vector<4x128xi32>
    %31 = arith.cmpi sge, %25, %30 : vector<4x128xi32>
    %c17_i32 = arith.constant 17 : i32
    %32 = vector.broadcast %c17_i32 : i32 to vector<4x128xi32>
    %33 = arith.cmpi slt, %25, %32 : vector<4x128xi32>
    %34 = arith.andi %31, %33 : vector<4x128xi1>
    %cst_14 = arith.constant 0.000000e+00 : f32
    %35 = vector.broadcast %cst_14 : f32 to vector<4x128xf32>
    %36 = arith.select %34, %29, %35 : vector<4x128xi1>, vector<4x128xf32>
    %c127_i32 = arith.constant 127 : i32
    %37 = tpu.dynamic_rotate %8 by %c127_i32 dim 1 : vector<4x128xf32>, i32 -> vector<4x128xf32>
    %c-1_i32 = arith.constant -1 : i32
    %38 = vector.broadcast %c-1_i32 : i32 to vector<4x128xi32>
    %39 = arith.cmpi sge, %25, %38 : vector<4x128xi32>
    %c15_i32 = arith.constant 15 : i32
    %40 = vector.broadcast %c15_i32 : i32 to vector<4x128xi32>
    %41 = arith.cmpi slt, %25, %40 : vector<4x128xi32>
    %42 = arith.andi %39, %41 : vector<4x128xi1>
    %cst_15 = arith.constant 0.000000e+00 : f32
    %43 = vector.broadcast %cst_15 : f32 to vector<4x128xf32>
    %44 = arith.select %42, %37, %43 : vector<4x128xi1>, vector<4x128xf32>
    %45 = tpu.concatenate %36, %8, %44, %26, %27 in 0 : vector<4x128xf32>, vector<4x128xf32>, vector<4x128xf32>, vector<1x128xf32>, vector<3x128xf32> -> vector<16x128xf32>
    %46 = arith.truncf %45 : vector<16x128xf32> to vector<16x128xbf16>
    %cst_16 = arith.constant dense<0.000000e+00> : vector<4x128xf32>
    %47 = tpu.matmul %28, %46, %cst_16 {dimension_numbers = #tpu.dot_dimension_numbers<[1], [0], [0], [1], [0, 0, 1, 1], [], []>} : vector<4x16xbf16>, vector<16x128xbf16>, vector<4x128xf32> -> vector<4x128xf32>
    %cst_17 = arith.constant 0.000000e+00 : f32
    %48 = vector.broadcast %cst_17 : f32 to vector<4x128xf32>
    %49 = arith.maximumf %47, %48 : vector<4x128xf32>
    %c0_18 = arith.constant 0 : index
    %c0_19 = arith.constant 0 : index
    %50 = vector.load %arg5[%c0_18, %c0_19] : memref<8x16xbf16, #tpu.memory_space<vmem>>, vector<8x16xbf16>
    %c1_i32_20 = arith.constant 1 : i32
    %51 = tpu.dynamic_rotate %49 by %c1_i32_20 dim 1 : vector<4x128xf32>, i32 -> vector<4x128xf32>
    %c1_i32_21 = arith.constant 1 : i32
    %52 = vector.broadcast %c1_i32_21 : i32 to vector<4x128xi32>
    %53 = arith.cmpi sge, %25, %52 : vector<4x128xi32>
    %c17_i32_22 = arith.constant 17 : i32
    %54 = vector.broadcast %c17_i32_22 : i32 to vector<4x128xi32>
    %55 = arith.cmpi slt, %25, %54 : vector<4x128xi32>
    %56 = arith.andi %53, %55 : vector<4x128xi1>
    %cst_23 = arith.constant 0.000000e+00 : f32
    %57 = vector.broadcast %cst_23 : f32 to vector<4x128xf32>
    %58 = arith.select %56, %51, %57 : vector<4x128xi1>, vector<4x128xf32>
    %c127_i32_24 = arith.constant 127 : i32
    %59 = tpu.dynamic_rotate %49 by %c127_i32_24 dim 1 : vector<4x128xf32>, i32 -> vector<4x128xf32>
    %c-1_i32_25 = arith.constant -1 : i32
    %60 = vector.broadcast %c-1_i32_25 : i32 to vector<4x128xi32>
    %61 = arith.cmpi sge, %25, %60 : vector<4x128xi32>
    %c15_i32_26 = arith.constant 15 : i32
    %62 = vector.broadcast %c15_i32_26 : i32 to vector<4x128xi32>
    %63 = arith.cmpi slt, %25, %62 : vector<4x128xi32>
    %64 = arith.andi %61, %63 : vector<4x128xi1>
    %cst_27 = arith.constant 0.000000e+00 : f32
    %65 = vector.broadcast %cst_27 : f32 to vector<4x128xf32>
    %66 = arith.select %64, %59, %65 : vector<4x128xi1>, vector<4x128xf32>
    %67 = tpu.concatenate %58, %49, %66, %26, %27 in 0 : vector<4x128xf32>, vector<4x128xf32>, vector<4x128xf32>, vector<1x128xf32>, vector<3x128xf32> -> vector<16x128xf32>
    %68 = arith.truncf %67 : vector<16x128xf32> to vector<16x128xbf16>
    %cst_28 = arith.constant dense<0.000000e+00> : vector<8x128xf32>
    %69 = tpu.matmul %50, %68, %cst_28 {dimension_numbers = #tpu.dot_dimension_numbers<[1], [0], [0], [1], [0, 0, 1, 1], [], []>} : vector<8x16xbf16>, vector<16x128xbf16>, vector<8x128xf32> -> vector<8x128xf32>
    %cst_29 = arith.constant 0.000000e+00 : f32
    %70 = vector.broadcast %cst_29 : f32 to vector<8x128xf32>
    %71 = arith.maximumf %69, %70 : vector<8x128xf32>
    %c0_30 = arith.constant 0 : index
    %c0_31 = arith.constant 0 : index
    %72 = vector.load %arg6[%c0_30, %c0_31] : memref<8x128xf32, #tpu.memory_space<vmem>>, vector<8x128xf32>
    tpu.vector_store %arg6[%c0_30, %c0_31], %71 {strides = array<i32>} : memref<8x128xf32, #tpu.memory_space<vmem>>, vector<8x128xf32>,
    return
  }
  func.func @transform_0(%arg0: i32) -> (i32, i32) {
    %c0_i32 = arith.constant 0 : i32
    %c0_i32_0 = arith.constant 0 : i32
    return %c0_i32, %arg0 : i32, i32
  }
  func.func @transform_1(%arg0: i32) -> (i32, i32) {
    %c0_i32 = arith.constant 0 : i32
    %c0_i32_0 = arith.constant 0 : i32
    %c0_i32_1 = arith.constant 0 : i32
    return %c0_i32, %c0_i32_0 : i32, i32
  }
  func.func @transform_2(%arg0: i32) -> (i32, i32) {
    %c0_i32 = arith.constant 0 : i32
    %c0_i32_0 = arith.constant 0 : i32
    %c0_i32_1 = arith.constant 0 : i32
    return %c0_i32, %c0_i32_0 : i32, i32
  }
  func.func @transform_3(%arg0: i32) -> (i32, i32) {
    %c0_i32 = arith.constant 0 : i32
    %c0_i32_0 = arith.constant 0 : i32
    %c0_i32_1 = arith.constant 0 : i32
    return %c0_i32, %c0_i32_0 : i32, i32
  }
  func.func @transform_4(%arg0: i32) -> (i32, i32) {
    %c0_i32 = arith.constant 0 : i32
    %c0_i32_0 = arith.constant 0 : i32
    %c0_i32_1 = arith.constant 0 : i32
    return %c0_i32, %c0_i32_0 : i32, i32
  }
  func.func @transform_5(%arg0: i32) -> (i32, i32) {
    %c0_i32 = arith.constant 0 : i32
    %c0_i32_0 = arith.constant 0 : i32
    return %c0_i32, %arg0 : i32, i32
  }
}

</mosaic_0001>

<llo_original>
// kernel: tpu_custom_call.1
$region0: #{tpu_custom_call.1}
  #allocation0 [shape = 'u32[]', space=smem, size = 0x4, offset = 0x4, fixed_abs, tag = 'smem constant byte address 0x4 - core index']
  #allocation1 [shape = 'u32[144,128]{1,0:T(1,128)}', space=vmem, size = 0x12000, scoped, tag = 'internal scratch']
  %s0 = inlined_call_operand.vmem [shape: f32[4,128], index: 0, kind: input, shape index: {}]
  %s1 = inlined_call_operand.vmem [shape: f32[4,1], index: 1, kind: input, shape index: {}]
  %s2 = inlined_call_operand.vmem [shape: f32[4,1], index: 2, kind: input, shape index: {}]
  %s3 = inlined_call_operand.vmem [shape: bf16[4,16], index: 3, kind: input, shape index: {}]
  %s4 = inlined_call_operand.vmem [shape: bf16[8,16], index: 4, kind: input, shape index: {}]
  %s5 = inlined_call_operand.hbm [shape: f32[8,128], index: 5, kind: output, shape index: {}]
  %s6 = sld [smem:[#allocation0]]
  $region30: #{tpu_custom_call.1} parent=0
    _
  %s8 = ssub.s32 1, %s6
  %s9 = scalar_select 0, %s8, %s6
  $region1: #{tpu_custom_call.1} parent=0
    #allocation2 [shape = 'u8[4096]{0}', space=vmem, size = 0x1000, scoped, tag = 'output window, operand 0, single buffered']
    #allocation3 [shape = 's32[1]{0}', space=sflag, size = 0x4, scoped, tag = 'scoped memory for tpu_custom_call.1']
    %10 = vsyncpa [#allocation3], 0
    // Predicated region
    $region2: #{tpu_custom_call.1} parent=1 // pred_check
      _
    $region3: #{tpu_custom_call.1} parent=1 // pred_check_branch
      %12 = sbr.rel (0) target = $region5
    $region4: #{tpu_custom_call.1} parent=1 // pred_region
      _
    $region5: #{tpu_custom_call.1} parent=1 // pred_fallthru
      _
    // Predicated region
    $region6: #{tpu_custom_call.1} parent=1 // pred_check
      _
    $region7: #{tpu_custom_call.1} parent=1 // pred_check_branch
      %14 = sbr.rel (0) target = $region9
    $region8: #{tpu_custom_call.1} parent=1 // pred_region
      _
    $region9: #{tpu_custom_call.1} parent=1 // pred_fallthru
      _
    // Predicated region
    $region10: #{tpu_custom_call.1} parent=1 // pred_check
      _
    $region11: #{tpu_custom_call.1} parent=1 // pred_check_branch
      %16 = sbr.rel (0) target = $region13
    $region12: #{tpu_custom_call.1} parent=1 // pred_region
      _
    $region13: #{tpu_custom_call.1} parent=1 // pred_fallthru
      _
    // Predicated region
    $region14: #{tpu_custom_call.1} parent=1 // pred_check
      _
    $region15: #{tpu_custom_call.1} parent=1 // pred_check_branch
      %18 = sbr.rel (0) target = $region17
    $region16: #{tpu_custom_call.1} parent=1 // pred_region
      _
    $region17: #{tpu_custom_call.1} parent=1 // pred_fallthru
      _
    // Predicated region
    $region18: #{tpu_custom_call.1} parent=1 // pred_check
      _
    $region19: #{tpu_custom_call.1} parent=1 // pred_check_branch
      %20 = sbr.rel (0) target = $region21
    $region20: #{tpu_custom_call.1} parent=1 // pred_region
      _
    $region21: #{tpu_custom_call.1} parent=1 // pred_fallthru
      _
    %v22 = vld [vmem:[%s0] sm:$0xf]
    %v23 = vld [vmem:[%s1] sm:$0xf]
    %25 = vset.pattern.permute.xlu0 0
    %26 = vperm.xlu0 %25, %v23
    %v27 = vpop.permute.xlu0 %26
    %v29 = vmul.f32 %v22, %v27
    %v30 = vld [vmem:[%s2] sm:$0xf]
    %32 = vset.pattern.permute.xlu0 0
    %33 = vperm.xlu0 %32, %v30
    %v34 = vpop.permute.xlu0 %33
    %v36 = vadd.f32 %v29, %v34
    %v37 = vmax.f32 %v36, 0.0
    %v38 = vlaneseq
    %v39 = vand.u32 %v38, 127
    %vm40 = vcmp.lt.s32.totalorder %v39, 0
    %v41 = vsub.s32 0, %v39
    %v42 = vsel %vm40, %v41, %v39
    %v43 = vshrl.u32 %v42, 4
    %v44 = vand.u32 %v42, 15
    %v45 = vsub.s32 0, %v44
    %v46 = vsel %vm40, %v45, %v44
    %vm47 = vcmp.ne.s32.totalorder %v46, 0
    %vm48 = vcmp.lt.s32.totalorder %v46, 0
    %vm49 = vmand %vm48, %vm47
    %v50 = vadd.s32 %v46, 16
    %v51 = vsel %vm49, %v50, %v46
    %v52 = vld [vmem:[%s3] sm:$0x3]
    %53 = vrot.lane.b32.xlu0 %v37, 1
    %v54 = vpop.permute.xlu0 %53
    %vm55 = vcmp.ge.s32.totalorder %v51, 1
    %vm56 = vcmp.lt.s32.totalorder %v51, 17
    %vm57 = vmand %vm55, %vm56
    %v58 = vsel %vm57, %v54, 0.0
    %59 = vrot.lane.b32.xlu0 %v37, 127
    %v60 = vpop.permute.xlu0 %59
    %vm61 = vcmp.ge.s32.totalorder %v51, 4294967295
    %vm62 = vcmp.lt.s32.totalorder %v51, 15
    %vm63 = vmand %vm61, %vm62
    %v64 = vsel %vm63, %v60, 0.0
    %v66 = vrot.slane %v37, 4
    %vm68 = vcmask 1043456
    %v69 = vsel %vm68, %v58, %v66
    %v70 = vsel %vm68, %v64, 1.0
    %vm71 = vcmask 1044480
    %v72 = vsel %vm71, %v70, 0.0
    %v73 = vpack.c.bf16 %v72, %v69
    %vm74 = vcmask 130048
    %v76 = vsel %vm74, %v52, 0
    %78 = vmatprep.subr.bf16.mxu0 0
    %79 = vmatpush1.bf16.msra.mxu0 %v73
    %80 = vmatprep.subr.bf16.mxu0 0
    %81 = vmatpush1.bf16.msra.mxu0 0
    %82 = vmatprep.subr.bf16.mxu0 0
    %83 = vmatpush1.bf16.msra.mxu0 0
    %84 = vmatprep.subr.bf16.mxu0 0
    %85 = vmatpush1.bf16.msra.mxu0 0
    %86 = vmatprep.subr.bf16.mxu0 0
    %87 = vmatpush1.bf16.msra.mxu0 0
    %88 = vmatprep.subr.bf16.mxu0 0
    %89 = vmatpush1.bf16.msra.mxu0 0
    %90 = vmatprep.subr.bf16.mxu0 0
    %91 = vmatpush1.bf16.msra.mxu0 0
    %92 = vmatprep.subr.bf16.mxu0 0
    %93 = vmatpush1.bf16.msra.mxu0 0
    %94 = vmatprep.subr.bf16.mxu0 0
    %95 = vmatpush1.bf16.msra.mxu0 0
    %96 = vmatprep.subr.bf16.mxu0 0
    %97 = vmatpush1.bf16.msra.mxu0 0
    %98 = vmatprep.subr.bf16.mxu0 0
    %99 = vmatpush1.bf16.msra.mxu0 0
    %100 = vmatprep.subr.bf16.mxu0 0
    %101 = vmatpush1.bf16.msra.mxu0 0
    %102 = vmatprep.subr.bf16.mxu0 0
    %103 = vmatpush1.bf16.msra.mxu0 0
    %104 = vmatprep.subr.bf16.mxu0 0
    %105 = vmatpush1.bf16.msra.mxu0 0
    %106 = vmatprep.subr.bf16.mxu0 0
    %107 = vmatpush1.bf16.msra.mxu0 0
    %108 = vmatprep.subr.bf16.mxu0 0
    %109 = vmatpush1.bf16.msra.mxu0 0
    %110 = vmatprep.mubr.bf16.mxu0 0
    %111 = vmatmul.mubr.bf16.gmra.mrb[0].mxu0 %v76
    %v112 = vpop.f32.mrb[0].mxu0
    %v113 = vadd.f32 0.0, %v112
    %v114 = vpop.f32.mrb[0].mxu0
    %v115 = vpop.f32.mrb[0].mxu0
    %v116 = vpop.f32.mrb[0].mxu0
    %117 = vdwg.mxu0
    %v118 = vmax.f32 %v113, 0.0
    %v119 = vld [vmem:[%s4] sm:$0xf]
    %120 = vrot.lane.b32.xlu0 %v118, 1
    %v121 = vpop.permute.xlu0 %120
    %v122 = vsel %vm57, %v121, 0.0
    %123 = vrot.lane.b32.xlu0 %v118, 127
    %v124 = vpop.permute.xlu0 %123
    %v125 = vsel %vm63, %v124, 0.0
    %v127 = vrot.slane %v118, 4
    %v129 = vsel %vm68, %v122, %v127
    %v130 = vsel %vm68, %v125, 1.0
    %v131 = vsel %vm71, %v130, 0.0
    %v132 = vpack.c.bf16 %v131, %v129
    %v134 = vsel %vm74, %v119, 0
    %136 = vmatprep.subr.bf16.mxu0 0
    %137 = vmatpush1.bf16.msra.mxu0 %v132
    %138 = vmatprep.subr.bf16.mxu0 0
    %139 = vmatpush1.bf16.msra.mxu0 0
    %140 = vmatprep.subr.bf16.mxu0 0
    %141 = vmatpush1.bf16.msra.mxu0 0
    %142 = vmatprep.subr.bf16.mxu0 0
    %143 = vmatpush1.bf16.msra.mxu0 0
    %144 = vmatprep.subr.bf16.mxu0 0
    %145 = vmatpush1.bf16.msra.mxu0 0
    %146 = vmatprep.subr.bf16.mxu0 0
    %147 = vmatpush1.bf16.msra.mxu0 0
    %148 = vmatprep.subr.bf16.mxu0 0
    %149 = vmatpush1.bf16.msra.mxu0 0
    %150 = vmatprep.subr.bf16.mxu0 0
    %151 = vmatpush1.bf16.msra.mxu0 0
    %152 = vmatprep.subr.bf16.mxu0 0
    %153 = vmatpush1.bf16.msra.mxu0 0
    %154 = vmatprep.subr.bf16.mxu0 0
    %155 = vmatpush1.bf16.msra.mxu0 0
    %156 = vmatprep.subr.bf16.mxu0 0
    %157 = vmatpush1.bf16.msra.mxu0 0
    %158 = vmatprep.subr.bf16.mxu0 0
    %159 = vmatpush1.bf16.msra.mxu0 0
    %160 = vmatprep.subr.bf16.mxu0 0
    %161 = vmatpush1.bf16.msra.mxu0 0
    %162 = vmatprep.subr.bf16.mxu0 0
    %163 = vmatpush1.bf16.msra.mxu0 0
    %164 = vmatprep.subr.bf16.mxu0 0
    %165 = vmatpush1.bf16.msra.mxu0 0
    %166 = vmatprep.subr.bf16.mxu0 0
    %167 = vmatpush1.bf16.msra.mxu0 0
    %168 = vmatprep.mubr.bf16.mxu0 0
    %169 = vmatmul.mubr.bf16.gmra.mrb[0].mxu0 %v134
    %v170 = vpop.f32.mrb[0].mxu0
    %v171 = vadd.f32 0.0, %v170
    %v172 = vpop.f32.mrb[0].mxu0
    %v173 = vpop.f32.mrb[0].mxu0
    %v174 = vpop.f32.mrb[0].mxu0
    %175 = vdwg.mxu0
    %v176 = vmax.f32 %v171, 0.0
    %177 = vst [vmem:[#allocation2] sm:$0xff] %v176
    // Predicated region
    $region22: #{tpu_custom_call.1} parent=1 // pred_check
      _
    $region23: #{tpu_custom_call.1} parent=1 // pred_check_branch
      %179 = sbr.rel (0) target = $region25
    $region24: #{tpu_custom_call.1} parent=1 // pred_region
      %s181 = ssub.s32 128, 128
      %182 = vsyncadd [#allocation3], %s181
      %s184 = sshll.u32 [#allocation2], 4
      %s185 = int_to_ptr.vmem [resolvable:$true] %s184
      %187 = dma.vmem_to_hbm [thread:$0]  %s185, 128, %s5, [#allocation3]
    $region25: #{tpu_custom_call.1} parent=1 // pred_fallthru
      _
    // Predicated region
    $region26: #{tpu_custom_call.1} parent=1 // pred_check
      _
    $region27: #{tpu_custom_call.1} parent=1 // pred_check_branch
      %189 = sbr.rel (0) target = $region29
    $region28: #{tpu_custom_call.1} parent=1 // pred_region
      %190 = dma.done [#allocation3], 128
    $region29: #{tpu_custom_call.1} parent=1 // pred_fallthru
      _
    %191 = vsyncpa [#allocation3], 1

</llo_original>
